<compile_context>
chip_gen: v5e
topology: v5e:2x2
jax: 0.10.0
libtpu: 0.0.40
codegen_flags: <defaults>
</compile_context>

<pallas_src>
import jax
import jax.numpy as jnp
from jax.experimental import pallas as pl
from jax.experimental.pallas import tpu as pltpu


def _sigmoid(z):
    # Exact sigmoid expressed via tanh: single EUP push + cheap VPU ops.
    return 0.5 * (jnp.tanh(0.5 * z) + 1.0)


def _make_kernel(uls, outdims, n_lin, matmul_dtype):
    """Build a kernel for a stack of NVP couplings fused into one call.

    refs = (x_ref, y_ref, *weight_bias_refs, out_ref)
      x_ref : [d,   BM]  f32, lane-dense batch tile
      y_ref : [n-d, BM]  f32
    Each coupling consumes n_lin (weight, bias) ref pairs.  Weights are the
    FUSED s/t matrices ([out, in], matmul_dtype); biases are [out, 1] f32.
    """
    def kernel(*refs):
        x_ref, y_ref = refs[0], refs[1]
        out_ref = refs[-1]
        prefs = refs[2:-1]

        x = x_ref[...]                      # [d,   BM] f32
        y = y_ref[...]                      # [n-d, BM] f32

        p = 0
        for ul, outdim in zip(uls, outdims):
            h = (y if ul == "up" else x).astype(matmul_dtype)
            for li in range(n_lin):
                w = prefs[p][...]           # [out, in]  matmul_dtype
                b = prefs[p + 1][...]       # [out, 1]   f32
                p += 2
                z = jnp.dot(w, h, preferred_element_type=jnp.float32) + b
                h = _sigmoid(z)             # f32
                if li + 1 < n_lin:
                    h = h.astype(matmul_dtype)
            s_out = h[:outdim, :]           # [outdim, BM] f32
            t_out = h[outdim:, :]
            if ul == "up":
                x = x * jnp.exp(s_out) + t_out
            else:
                y = y * jnp.exp(s_out) + t_out

        # Single full-tile, lane-dense store (no masked column sub-stores).
        out_ref[...] = jnp.concatenate([x, y], axis=0).astype(out_ref.dtype)

    return kernel


def _fuse_st(s_params, t_params, matmul_dtype):
    """Fuse the s/t FCNets of one coupling into a single parameter stack.

    Input params are PyTorch nn.Linear layout: w [out, in], b [out].
    Layer 0: row-concat (both nets read the same input); later layers:
    block-diagonal.  Mathematically identical to two separate nets.
    Returns list of (w [O, I] matmul_dtype, b [O, 1] f32).
    """
    fused = []
    for li, ((ws, bs), (wt, bt)) in enumerate(zip(s_params, t_params)):
        if li == 0:
            w = jnp.concatenate([ws, wt], axis=0)
        else:
            z_up = jnp.zeros((ws.shape[0], wt.shape[1]), ws.dtype)
            z_lo = jnp.zeros((wt.shape[0], ws.shape[1]), wt.dtype)
            w = jnp.concatenate(
                [jnp.concatenate([ws, z_up], axis=1),
                 jnp.concatenate([z_lo, wt], axis=1)],
                axis=0,
            )
        b = jnp.concatenate([bs, bt], axis=0)
        fused.append((w.astype(matmul_dtype),
                      b.reshape(-1, 1).astype(jnp.float32)))
    return fused


def inn_forward(xy, couplings, *, n, d, bm=256, matmul_dtype=jnp.float32):
    """Run a stack of NVP couplings fused into ONE pallas_call.

    xy        : [B, n] f32
    couplings : list of (ul, s_params, t_params); params in PyTorch layout.
    Returns   : [B, n] f32
    """
    b = xy.shape[0]
    b_pad = ((b + bm - 1) // bm) * bm
    grid = (b_pad // bm,)

    # Layout plumbing: batch onto lanes, split x/y once, zero-pad the tail.
    xy_t = jnp.transpose(xy).astype(jnp.float32)          # [n, B]
    if b_pad != b:
        xy_t = jnp.pad(xy_t, ((0, 0), (0, b_pad - b)))
    x_t = xy_t[:d, :]                                     # [d,   B_pad]
    y_t = xy_t[d:, :]                                     # [n-d, B_pad]

    uls, outdims, flat_params = [], [], []
    for ul, s_params, t_params in couplings:
        uls.append(ul)
        outdims.append(d if ul == "up" else n - d)
        for w, bias in _fuse_st(s_params, t_params, matmul_dtype):
            flat_params.append(w)
            flat_params.append(bias)
    n_lin = len(couplings[0][1])

    act_specs = [
        pl.BlockSpec((d, bm), lambda i: (0, i)),
        pl.BlockSpec((n - d, bm), lambda i: (0, i)),
    ]
    # Weights/biases: full-array blocks with a constant index map — they stay
    # resident in VMEM across the whole batch grid.
    param_specs = [pl.BlockSpec(p.shape, lambda i: (0, 0)) for p in flat_params]
    out_spec = pl.BlockSpec((n, bm), lambda i: (0, i))

    kernel = _make_kernel(tuple(uls), tuple(outdims), n_lin, matmul_dtype)
    out_t = pl.pallas_call(
        kernel,
        out_shape=jax.ShapeDtypeStruct((n, b_pad), jnp.float32),
        grid=grid,
        in_specs=act_specs + param_specs,
        out_specs=out_spec,
        compiler_params=pltpu.CompilerParams(
            dimension_semantics=("parallel",),  # megacore-shard the batch grid
        ),
    )(x_t, y_t, *flat_params)

    return jnp.transpose(out_t[:, :b])                    # back to [B, n]


def nvpinn_forward(xy, s_params, t_params, *, n, d, ul, bm=256,
                   matmul_dtype=jnp.float32):
    """NVPINNMod.forward (one coupling) as a Pallas kernel."""
    return inn_forward(xy, [(ul, s_params, t_params)], n=n, d=d, bm=bm,
                       matmul_dtype=matmul_dtype)


# ----------------------------- reference / init -----------------------------

def init_fcnet_params(key, indim, outdim, nlayers, width):
    """Deterministic PyTorch nn.Linear-style init: w [out, in], b [out]."""
    dims = [(indim, width)] + [(width, width)] * nlayers + [(width, outdim)]
    params = []
    for (din, dout) in dims:
        key, kw, kb = jax.random.split(key, 3)
        bound = 1.0 / jnp.sqrt(din)
        w = jax.random.uniform(kw, (dout, din), jnp.float32, -bound, bound)
        b = jax.random.uniform(kb, (dout,), jnp.float32, -bound, bound)
        params.append((w, b))
    return key, params


def _fcnet_ref(h, params):
    for w, b in params:
        h = jax.nn.sigmoid(h @ w.T + b)
    return h


def nvpinn_reference(xy, s_params, t_params, *, d, ul):
    """Pure-JAX reference with UNFUSED s/t nets (mirrors the PyTorch module)."""
    x = xy[:, :d]
    y = xy[:, d:]
    if ul == "up":
        return jnp.concatenate(
            [x * jnp.exp(_fcnet_ref(y, s_params)) + _fcnet_ref(y, t_params), y],
            axis=1)
    return jnp.concatenate(
        [x, y * jnp.exp(_fcnet_ref(x, s_params)) + _fcnet_ref(x, t_params)],
        axis=1)


if __name__ == "__main__":
    N, D, NLAYERS, WIDTH = 8, 4, 2, 32
    B = 640                      # not a multiple of the 256-lane batch tile -> tail path

    key = jax.random.PRNGKey(0)
    key, s_up = init_fcnet_params(key, N - D, D, NLAYERS, WIDTH)
    key, t_up = init_fcnet_params(key, N - D, D, NLAYERS, WIDTH)
    key, s_lo = init_fcnet_params(key, D, N - D, NLAYERS, WIDTH)
    key, t_lo = init_fcnet_params(key, D, N - D, NLAYERS, WIDTH)
    key, kx = jax.random.split(key)
    xy = jax.random.normal(kx, (B, N), jnp.float32)

    # 1) NVPINNMod forward, ul='up' (the module spec), f32 matmuls.
    out_up = jax.block_until_ready(
        nvpinn_forward(xy, s_up, t_up, n=N, d=D, ul="up"))
    ref_up = nvpinn_reference(xy, s_up, t_up, d=D, ul="up")
    assert out_up.shape == (B, N)
    assert jnp.allclose(out_up, ref_up, atol=1e-4, rtol=1e-4), "up mismatch"

    # 2) NVPINNMod forward, ul='low'.
    out_lo = jax.block_until_ready(
        nvpinn_forward(xy, s_lo, t_lo, n=N, d=D, ul="low"))
    ref_lo = nvpinn_reference(xy, s_lo, t_lo, d=D, ul="low")
    assert jnp.allclose(out_lo, ref_lo, atol=1e-4, rtol=1e-4), "low mismatch"

    # 3) Three couplings (up/low/up) fused into ONE pallas_call:
    #    weights stay VMEM-resident, launch/DMA cost amortized.
    couplings = [("up", s_up, t_up), ("low", s_lo, t_lo), ("up", s_up, t_up)]
    out_stack = jax.block_until_ready(inn_forward(xy, couplings, n=N, d=D))
    ref_stack = xy
    for ul, sp, tp in couplings:
        ref_stack = nvpinn_reference(ref_stack, sp, tp, d=D, ul=ul)
    assert jnp.allclose(out_stack, ref_stack, atol=1e-4, rtol=1e-4), "stack mismatch"

    # 4) bf16 matmul path (v6e/v7x MXU throughput); sigmoid/exp/coupling in f32.
    out_bf16 = jax.block_until_ready(
        nvpinn_forward(xy, s_up, t_up, n=N, d=D, ul="up",
                       matmul_dtype=jnp.bfloat16))
    assert jnp.allclose(out_bf16, ref_up, atol=5e-2, rtol=5e-2), "bf16 mismatch"

    print("KERNEL_OK")
</pallas_src>

<mosaic_0001>
module attributes {stable_mosaic.version = 11 : i64} {
  func.func @kernel(%arg0: i32, %arg1: memref<4x256xf32, #tpu.memory_space<vmem>>, %arg2: memref<4x256xf32, #tpu.memory_space<vmem>>, %arg3: memref<64x4xf32, #tpu.memory_space<vmem>>, %arg4: memref<64x1xf32, #tpu.memory_space<vmem>>, %arg5: memref<64x64xf32, #tpu.memory_space<vmem>>, %arg6: memref<64x1xf32, #tpu.memory_space<vmem>>, %arg7: memref<64x64xf32, #tpu.memory_space<vmem>>, %arg8: memref<64x1xf32, #tpu.memory_space<vmem>>, %arg9: memref<8x64xf32, #tpu.memory_space<vmem>>, %arg10: memref<8x1xf32, #tpu.memory_space<vmem>>, %arg11: memref<8x256xf32, #tpu.memory_space<vmem>>) attributes {dimension_semantics = [#tpu.dimension_semantics<parallel>], iteration_bounds = array<i64: 3>, scalar_prefetch = 0 : i64, scratch_operands = 0 : i64, tpu.core_type = #tpu.core_type<tc>, window_params = [{transform_indices = @transform_0, window_bounds = array<i64: 4, 256>}, {transform_indices = @transform_1, window_bounds = array<i64: 4, 256>}, {pipeline_mode = #tpu.pipeline_mode<synchronous>, transform_indices = @transform_2, window_bounds = array<i64: 64, 4>}, {pipeline_mode = #tpu.pipeline_mode<synchronous>, transform_indices = @transform_3, window_bounds = array<i64: 64, 1>}, {pipeline_mode = #tpu.pipeline_mode<synchronous>, transform_indices = @transform_4, window_bounds = array<i64: 64, 64>}, {pipeline_mode = #tpu.pipeline_mode<synchronous>, transform_indices = @transform_5, window_bounds = array<i64: 64, 1>}, {pipeline_mode = #tpu.pipeline_mode<synchronous>, transform_indices = @transform_6, window_bounds = array<i64: 64, 64>}, {pipeline_mode = #tpu.pipeline_mode<synchronous>, transform_indices = @transform_7, window_bounds = array<i64: 64, 1>}, {pipeline_mode = #tpu.pipeline_mode<synchronous>, transform_indices = @transform_8, window_bounds = array<i64: 8, 64>}, {pipeline_mode = #tpu.pipeline_mode<synchronous>, transform_indices = @transform_9, window_bounds = array<i64: 8, 1>}, {transform_indices = @transform_10, window_bounds = array<i64: 8, 256>}]} {
    %c0 = arith.constant 0 : index
    %c0_0 = arith.constant 0 : index
    %0 = vector.load %arg1[%c0, %c0_0] : memref<4x256xf32, #tpu.memory_space<vmem>>, vector<4x256xf32>
    %c0_1 = arith.constant 0 : index
    %c0_2 = arith.constant 0 : index
    %1 = vector.load %arg2[%c0_1, %c0_2] : memref<4x256xf32, #tpu.memory_space<vmem>>, vector<4x256xf32>
    %c0_3 = arith.constant 0 : index
    %c0_4 = arith.constant 0 : index
    %2 = vector.load %arg3[%c0_3, %c0_4] : memref<64x4xf32, #tpu.memory_space<vmem>>, vector<64x4xf32>
    %c0_5 = arith.constant 0 : index
    %c0_6 = arith.constant 0 : index
    %3 = vector.load %arg4[%c0_5, %c0_6] : memref<64x1xf32, #tpu.memory_space<vmem>>, vector<64x1xf32>
    %cst = arith.constant dense<0.000000e+00> : vector<64x256xf32>
    %4 = tpu.matmul %2, %1, %cst {dimension_numbers = #tpu.dot_dimension_numbers<[1], [0], [0], [1], [0, 0, 1, 1], [], []>} : vector<64x4xf32>, vector<4x256xf32>, vector<64x256xf32> -> vector<64x256xf32>
    %5 = vector.broadcast %3 : vector<64x1xf32> to vector<64x256xf32>
    %6 = arith.addf %4, %5 : vector<64x256xf32>
    %cst_7 = arith.constant 5.000000e-01 : f32
    %7 = vector.broadcast %cst_7 : f32 to vector<64x256xf32>
    %8 = arith.mulf %7, %6 : vector<64x256xf32>
    %9 = math.tanh %8 : vector<64x256xf32>
    %cst_8 = arith.constant 1.000000e+00 : f32
    %10 = vector.broadcast %cst_8 : f32 to vector<64x256xf32>
    %11 = arith.addf %9, %10 : vector<64x256xf32>
    %cst_9 = arith.constant 5.000000e-01 : f32
    %12 = vector.broadcast %cst_9 : f32 to vector<64x256xf32>
    %13 = arith.mulf %12, %11 : vector<64x256xf32>
    %c0_10 = arith.constant 0 : index
    %c0_11 = arith.constant 0 : index
    %14 = vector.load %arg5[%c0_10, %c0_11] : memref<64x64xf32, #tpu.memory_space<vmem>>, vector<64x64xf32>
    %c0_12 = arith.constant 0 : index
    %c0_13 = arith.constant 0 : index
    %15 = vector.load %arg6[%c0_12, %c0_13] : memref<64x1xf32, #tpu.memory_space<vmem>>, vector<64x1xf32>
    %cst_14 = arith.constant dense<0.000000e+00> : vector<64x256xf32>
    %16 = tpu.matmul %14, %13, %cst_14 {dimension_numbers = #tpu.dot_dimension_numbers<[1], [0], [0], [1], [0, 0, 1, 1], [], []>} : vector<64x64xf32>, vector<64x256xf32>, vector<64x256xf32> -> vector<64x256xf32>
    %17 = vector.broadcast %15 : vector<64x1xf32> to vector<64x256xf32>
    %18 = arith.addf %16, %17 : vector<64x256xf32>
    %cst_15 = arith.constant 5.000000e-01 : f32
    %19 = vector.broadcast %cst_15 : f32 to vector<64x256xf32>
    %20 = arith.mulf %19, %18 : vector<64x256xf32>
    %21 = math.tanh %20 : vector<64x256xf32>
    %cst_16 = arith.constant 1.000000e+00 : f32
    %22 = vector.broadcast %cst_16 : f32 to vector<64x256xf32>
    %23 = arith.addf %21, %22 : vector<64x256xf32>
    %cst_17 = arith.constant 5.000000e-01 : f32
    %24 = vector.broadcast %cst_17 : f32 to vector<64x256xf32>
    %25 = arith.mulf %24, %23 : vector<64x256xf32>
    %c0_18 = arith.constant 0 : index
    %c0_19 = arith.constant 0 : index
    %26 = vector.load %arg7[%c0_18, %c0_19] : memref<64x64xf32, #tpu.memory_space<vmem>>, vector<64x64xf32>
    %c0_20 = arith.constant 0 : index
    %c0_21 = arith.constant 0 : index
    %27 = vector.load %arg8[%c0_20, %c0_21] : memref<64x1xf32, #tpu.memory_space<vmem>>, vector<64x1xf32>
    %cst_22 = arith.constant dense<0.000000e+00> : vector<64x256xf32>
    %28 = tpu.matmul %26, %25, %cst_22 {dimension_numbers = #tpu.dot_dimension_numbers<[1], [0], [0], [1], [0, 0, 1, 1], [], []>} : vector<64x64xf32>, vector<64x256xf32>, vector<64x256xf32> -> vector<64x256xf32>
    %29 = vector.broadcast %27 : vector<64x1xf32> to vector<64x256xf32>
    %30 = arith.addf %28, %29 : vector<64x256xf32>
    %cst_23 = arith.constant 5.000000e-01 : f32
    %31 = vector.broadcast %cst_23 : f32 to vector<64x256xf32>
    %32 = arith.mulf %31, %30 : vector<64x256xf32>
    %33 = math.tanh %32 : vector<64x256xf32>
    %cst_24 = arith.constant 1.000000e+00 : f32
    %34 = vector.broadcast %cst_24 : f32 to vector<64x256xf32>
    %35 = arith.addf %33, %34 : vector<64x256xf32>
    %cst_25 = arith.constant 5.000000e-01 : f32
    %36 = vector.broadcast %cst_25 : f32 to vector<64x256xf32>
    %37 = arith.mulf %36, %35 : vector<64x256xf32>
    %c0_26 = arith.constant 0 : index
    %c0_27 = arith.constant 0 : index
    %38 = vector.load %arg9[%c0_26, %c0_27] : memref<8x64xf32, #tpu.memory_space<vmem>>, vector<8x64xf32>
    %c0_28 = arith.constant 0 : index
    %c0_29 = arith.constant 0 : index
    %39 = vector.load %arg10[%c0_28, %c0_29] : memref<8x1xf32, #tpu.memory_space<vmem>>, vector<8x1xf32>
    %cst_30 = arith.constant dense<0.000000e+00> : vector<8x256xf32>
    %40 = tpu.matmul %38, %37, %cst_30 {dimension_numbers = #tpu.dot_dimension_numbers<[1], [0], [0], [1], [0, 0, 1, 1], [], []>} : vector<8x64xf32>, vector<64x256xf32>, vector<8x256xf32> -> vector<8x256xf32>
    %41 = vector.broadcast %39 : vector<8x1xf32> to vector<8x256xf32>
    %42 = arith.addf %40, %41 : vector<8x256xf32>
    %cst_31 = arith.constant 5.000000e-01 : f32
    %43 = vector.broadcast %cst_31 : f32 to vector<8x256xf32>
    %44 = arith.mulf %43, %42 : vector<8x256xf32>
    %45 = math.tanh %44 : vector<8x256xf32>
    %cst_32 = arith.constant 1.000000e+00 : f32
    %46 = vector.broadcast %cst_32 : f32 to vector<8x256xf32>
    %47 = arith.addf %45, %46 : vector<8x256xf32>
    %cst_33 = arith.constant 5.000000e-01 : f32
    %48 = vector.broadcast %cst_33 : f32 to vector<8x256xf32>
    %49 = arith.mulf %48, %47 : vector<8x256xf32>
    %50 = vector.extract_strided_slice %49 {offsets = [0, 0], sizes = [4, 256], strides = [1, 1]} : vector<8x256xf32> to vector<4x256xf32>
    %51 = vector.extract_strided_slice %49 {offsets = [4, 0], sizes = [4, 256], strides = [1, 1]} : vector<8x256xf32> to vector<4x256xf32>
    %52 = math.exp %50 : vector<4x256xf32>
    %53 = arith.mulf %0, %52 : vector<4x256xf32>
    %54 = arith.addf %53, %51 : vector<4x256xf32>
    %55 = tpu.concatenate %54, %1 in 0 : vector<4x256xf32>, vector<4x256xf32> -> vector<8x256xf32>
    %c0_34 = arith.constant 0 : index
    %c0_35 = arith.constant 0 : index
    %56 = vector.load %arg11[%c0_34, %c0_35] : memref<8x256xf32, #tpu.memory_space<vmem>>, vector<8x256xf32>
    tpu.vector_store %arg11[%c0_34, %c0_35], %55 {strides = array<i32>} : memref<8x256xf32, #tpu.memory_space<vmem>>, vector<8x256xf32>,
    return
  }
  func.func @transform_0(%arg0: i32) -> (i32, i32) {
    %c0_i32 = arith.constant 0 : i32
    %c0_i32_0 = arith.constant 0 : i32
    return %c0_i32, %arg0 : i32, i32
  }
  func.func @transform_1(%arg0: i32) -> (i32, i32) {
    %c0_i32 = arith.constant 0 : i32
    %c0_i32_0 = arith.constant 0 : i32
    return %c0_i32, %arg0 : i32, i32
  }
  func.func @transform_2(%arg0: i32) -> (i32, i32) {
    %c0_i32 = arith.constant 0 : i32
    %c0_i32_0 = arith.constant 0 : i32
    %c0_i32_1 = arith.constant 0 : i32
    return %c0_i32, %c0_i32_0 : i32, i32
  }
  func.func @transform_3(%arg0: i32) -> (i32, i32) {
    %c0_i32 = arith.constant 0 : i32
    %c0_i32_0 = arith.constant 0 : i32
    %c0_i32_1 = arith.constant 0 : i32
    return %c0_i32, %c0_i32_0 : i32, i32
  }
  func.func @transform_4(%arg0: i32) -> (i32, i32) {
    %c0_i32 = arith.constant 0 : i32
    %c0_i32_0 = arith.constant 0 : i32
    %c0_i32_1 = arith.constant 0 : i32
    return %c0_i32, %c0_i32_0 : i32, i32
  }
  func.func @transform_5(%arg0: i32) -> (i32, i32) {
    %c0_i32 = arith.constant 0 : i32
    %c0_i32_0 = arith.constant 0 : i32
    %c0_i32_1 = arith.constant 0 : i32
    return %c0_i32, %c0_i32_0 : i32, i32
  }
  func.func @transform_6(%arg0: i32) -> (i32, i32) {
    %c0_i32 = arith.constant 0 : i32
    %c0_i32_0 = arith.constant 0 : i32
    %c0_i32_1 = arith.constant 0 : i32
    return %c0_i32, %c0_i32_0 : i32, i32
  }
  func.func @transform_7(%arg0: i32) -> (i32, i32) {
    %c0_i32 = arith.constant 0 : i32
    %c0_i32_0 = arith.constant 0 : i32
    %c0_i32_1 = arith.constant 0 : i32
    return %c0_i32, %c0_i32_0 : i32, i32
  }
  func.func @transform_8(%arg0: i32) -> (i32, i32) {
    %c0_i32 = arith.constant 0 : i32
    %c0_i32_0 = arith.constant 0 : i32
    %c0_i32_1 = arith.constant 0 : i32
    return %c0_i32, %c0_i32_0 : i32, i32
  }
  func.func @transform_9(%arg0: i32) -> (i32, i32) {
    %c0_i32 = arith.constant 0 : i32
    %c0_i32_0 = arith.constant 0 : i32
    %c0_i32_1 = arith.constant 0 : i32
    return %c0_i32, %c0_i32_0 : i32, i32
  }
  func.func @transform_10(%arg0: i32) -> (i32, i32) {
    %c0_i32 = arith.constant 0 : i32
    %c0_i32_0 = arith.constant 0 : i32
    return %c0_i32, %arg0 : i32, i32
  }
}

</mosaic_0001>

<llo_original>
// kernel: tpu_custom_call.1
$region0: #{tpu_custom_call.1}
  #allocation0 [shape = 'u32[]', space=smem, size = 0x4, offset = 0x4, fixed_abs, tag = 'smem constant byte address 0x4 - core index']
  #allocation1 [shape = 'u32[72,128]{1,0:T(1,128)}', space=vmem, size = 0x9000, scoped, tag = 'internal scratch']
  %s0 = inlined_call_operand.vmem [shape: f32[4,768], index: 0, kind: input, shape index: {}]
  %s1 = inlined_call_operand.vmem [shape: f32[4,768], index: 1, kind: input, shape index: {}]
  %s2 = inlined_call_operand.vmem [shape: f32[64,4], index: 2, kind: input, shape index: {}]
  %s3 = inlined_call_operand.vmem [shape: f32[64,1], index: 3, kind: input, shape index: {}]
  %s4 = inlined_call_operand.vmem [shape: f32[64,64], index: 4, kind: input, shape index: {}]
  %s5 = inlined_call_operand.vmem [shape: f32[64,1], index: 5, kind: input, shape index: {}]
  %s6 = inlined_call_operand.vmem [shape: f32[64,64], index: 6, kind: input, shape index: {}]
  %s7 = inlined_call_operand.vmem [shape: f32[64,1], index: 7, kind: input, shape index: {}]
  %s8 = inlined_call_operand.vmem [shape: f32[8,64], index: 8, kind: input, shape index: {}]
  %s9 = inlined_call_operand.vmem [shape: f32[8,1], index: 9, kind: input, shape index: {}]
  %s10 = inlined_call_operand.hbm [shape: f32[8,768], index: 10, kind: output, shape index: {}]
  %s11 = sld [smem:[#allocation0]]
  $region73: #{tpu_custom_call.1} parent=0
    _
  %s13 = ssub.s32 1, %s11
  %s14 = scalar_select 0, %s13, %s11
  $region1: #{tpu_custom_call.1} parent=0
    #allocation2 [shape = 'u8[16384]{0}', space=vmem, size = 0x4000, scoped, tag = 'output window, operand 0']
    #allocation3 [shape = 's32[2]{0}', space=sflag, size = 0x8, scoped, tag = 'scoped memory for tpu_custom_call.1']
    %15 = vsyncpa [#allocation3], 0
    %s16 = scalar_lea.sflag [#allocation3], 1
    %17 = vsyncpa %s16, 0
    loop: start=0, step=1, limit=5
    $region2: #{tpu_custom_call.1} parent=1 // loop_pre_header
      _
    $region3: #{tpu_custom_call.1} parent=1 // loop_header
      %s19 = sphi 0, %s23
      %p20 = scmp.ge.s32.totalorder %s19, 5
      %s29 = sphi 0, %s31
      %s32 = sphi 0, %s29
      %s33 = sphi 0, %s32
      %s49 = sphi 0, %s33
      %s55 = sphi 0, %s57
      %s58 = sphi 0, %s55
      %s59 = sphi 0, %s58
      %s75 = sphi 0, %s59
      %s79 = sphi 0, %s79
      %s81 = sphi 0, %s79
      %s82 = sphi 0, %s81
      %s96 = sphi 0, %s82
      %s100 = sphi 0, %s100
      %s102 = sphi 0, %s100
      %s103 = sphi 0, %s102
      %s117 = sphi 0, %s103
      %s121 = sphi 0, %s121
      %s123 = sphi 0, %s121
      %s124 = sphi 0, %s123
      %s138 = sphi 0, %s124
      %s142 = sphi 0, %s142
      %s144 = sphi 0, %s142
      %s145 = sphi 0, %s144
      %s159 = sphi 0, %s145
      %s163 = sphi 0, %s163
      %s165 = sphi 0, %s163
      %s166 = sphi 0, %s165
      %s180 = sphi 0, %s166
      %s184 = sphi 0, %s184
      %s186 = sphi 0, %s184
      %s187 = sphi 0, %s186
      %s201 = sphi 0, %s187
      %s205 = sphi 0, %s205
      %s207 = sphi 0, %s205
      %s208 = sphi 0, %s207
      %s222 = sphi 0, %s208
      %s226 = sphi 0, %s226
      %s228 = sphi 0, %s226
      %s229 = sphi 0, %s228
      %s243 = sphi 0, %s229
      %s249 = sphi 0, %s251
      %s252 = sphi 0, %s249
      %s253 = sphi 0, %s252
      %s269 = sphi 0, %s253
    $region4: #{tpu_custom_call.1} parent=1 // loop_header_branch
      %22 = sbr.rel (%p20) target = $region8
    $region5: #{tpu_custom_call.1} parent=1 // loop_body
      %s24 = ssub.s32 %s19, 1
      %s25 = ssub.s32 %s19, 2
      %s26 = sadd.s32 %s19, 1
      %s27 = ssub.s32 %s19, %s26
      %p28 = scmp.eq.s32.totalorder %s27, 0
      %s30 = sadd.s32 %s29, 1
      %s31 = scalar_select %p28, %s29, %s30
      %p34 = pneg %p28
      %p35 = scmp.eq.s32.totalorder %s19, 2
      %p36 = por %p34, %p35
      %p37 = scmp.ne.s32.totalorder %s29, %s32
      %p38 = scmp.eq.s32.totalorder %s19, 0
      %p39 = por %p37, %p38
      %p40 = scmp.ne.s32.totalorder %s29, %s32
      %p41 = scmp.eq.s32.totalorder %s24, 2
      %p42 = por %p40, %p41
      %p43 = scmp.ne.s32.totalorder %s32, %s33
      %p44 = scmp.eq.s32.totalorder %s24, 0
      %p45 = por %p43, %p44
      %p46 = scmp.ne.s32.totalorder %s32, %s33
      %p47 = scmp.eq.s32.totalorder %s25, 2
      %p48 = por %p46, %p47
      %p50 = scmp.ne.s32.totalorder %s33, %s49
      %p51 = scmp.eq.s32.totalorder %s25, 0
      %p52 = por %p50, %p51
      %s53 = ssub.s32 %s19, %s26
      %p54 = scmp.eq.s32.totalorder %s53, 0
      %s56 = sadd.s32 %s55, 1
      %s57 = scalar_select %p54, %s55, %s56
      %p60 = pneg %p54
      %p61 = scmp.eq.s32.totalorder %s19, 2
      %p62 = por %p60, %p61
      %p63 = scmp.ne.s32.totalorder %s55, %s58
      %p64 = scmp.eq.s32.totalorder %s19, 0
      %p65 = por %p63, %p64
      %p66 = scmp.ne.s32.totalorder %s55, %s58
      %p67 = scmp.eq.s32.totalorder %s24, 2
      %p68 = por %p66, %p67
      %p69 = scmp.ne.s32.totalorder %s58, %s59
      %p70 = scmp.eq.s32.totalorder %s24, 0
      %p71 = por %p69, %p70
      %p72 = scmp.ne.s32.totalorder %s58, %s59
      %p73 = scmp.eq.s32.totalorder %s25, 2
      %p74 = por %p72, %p73
      %p76 = scmp.ne.s32.totalorder %s59, %s75
      %p77 = scmp.eq.s32.totalorder %s25, 0
      %p78 = por %p76, %p77
      %s80 = sadd.s32 %s79, 1
      %p83 = scmp.eq.s32.totalorder %s19, 2
      %p84 = scmp.ne.s32.totalorder %s79, %s81
      %p85 = scmp.eq.s32.totalorder %s19, 0
      %p86 = por %p84, %p85
      %p87 = scmp.ne.s32.totalorder %s79, %s81
      %p88 = scmp.eq.s32.totalorder %s24, 2
      %p89 = por %p87, %p88
      %p90 = scmp.ne.s32.totalorder %s81, %s82
      %p91 = scmp.eq.s32.totalorder %s24, 0
      %p92 = por %p90, %p91
      %p93 = scmp.ne.s32.totalorder %s81, %s82
      %p94 = scmp.eq.s32.totalorder %s25, 2
      %p95 = por %p93, %p94
      %p97 = scmp.ne.s32.totalorder %s82, %s96
      %p98 = scmp.eq.s32.totalorder %s25, 0
      %p99 = por %p97, %p98
      %s101 = sadd.s32 %s100, 1
      %p104 = scmp.eq.s32.totalorder %s19, 2
      %p105 = scmp.ne.s32.totalorder %s100, %s102
      %p106 = scmp.eq.s32.totalorder %s19, 0
      %p107 = por %p105, %p106
      %p108 = scmp.ne.s32.totalorder %s100, %s102
      %p109 = scmp.eq.s32.totalorder %s24, 2
      %p110 = por %p108, %p109
      %p111 = scmp.ne.s32.totalorder %s102, %s103
      %p112 = scmp.eq.s32.totalorder %s24, 0
      %p113 = por %p111, %p112
      %p114 = scmp.ne.s32.totalorder %s102, %s103
      %p115 = scmp.eq.s32.totalorder %s25, 2
      %p116 = por %p114, %p115
      %p118 = scmp.ne.s32.totalorder %s103, %s117
      %p119 = scmp.eq.s32.totalorder %s25, 0
      %p120 = por %p118, %p119
      %s122 = sadd.s32 %s121, 1
      %p125 = scmp.eq.s32.totalorder %s19, 2
      %p126 = scmp.ne.s32.totalorder %s121, %s123
      %p127 = scmp.eq.s32.totalorder %s19, 0
      %p128 = por %p126, %p127
      %p129 = scmp.ne.s32.totalorder %s121, %s123
      %p130 = scmp.eq.s32.totalorder %s24, 2
      %p131 = por %p129, %p130
      %p132 = scmp.ne.s32.totalorder %s123, %s124
      %p133 = scmp.eq.s32.totalorder %s24, 0
      %p134 = por %p132, %p133
      %p135 = scmp.ne.s32.totalorder %s123, %s124
      %p136 = scmp.eq.s32.totalorder %s25, 2
      %p137 = por %p135, %p136
      %p139 = scmp.ne.s32.totalorder %s124, %s138
      %p140 = scmp.eq.s32.totalorder %s25, 0
      %p141 = por %p139, %p140
      %s143 = sadd.s32 %s142, 1
      %p146 = scmp.eq.s32.totalorder %s19, 2
      %p147 = scmp.ne.s32.totalorder %s142, %s144
      %p148 = scmp.eq.s32.totalorder %s19, 0
      %p149 = por %p147, %p148
      %p150 = scmp.ne.s32.totalorder %s142, %s144
      %p151 = scmp.eq.s32.totalorder %s24, 2
      %p152 = por %p150, %p151
      %p153 = scmp.ne.s32.totalorder %s144, %s145
      %p154 = scmp.eq.s32.totalorder %s24, 0
      %p155 = por %p153, %p154
      %p156 = scmp.ne.s32.totalorder %s144, %s145
      %p157 = scmp.eq.s32.totalorder %s25, 2
      %p158 = por %p156, %p157
      %p160 = scmp.ne.s32.totalorder %s145, %s159
      %p161 = scmp.eq.s32.totalorder %s25, 0
      %p162 = por %p160, %p161
      %s164 = sadd.s32 %s163, 1
      %p167 = scmp.eq.s32.totalorder %s19, 2
      %p168 = scmp.ne.s32.totalorder %s163, %s165
      %p169 = scmp.eq.s32.totalorder %s19, 0
      %p170 = por %p168, %p169
      %p171 = scmp.ne.s32.totalorder %s163, %s165
      %p172 = scmp.eq.s32.totalorder %s24, 2
      %p173 = por %p171, %p172
      %p174 = scmp.ne.s32.totalorder %s165, %s166
      %p175 = scmp.eq.s32.totalorder %s24, 0
      %p176 = por %p174, %p175
      %p177 = scmp.ne.s32.totalorder %s165, %s166
      %p178 = scmp.eq.s32.totalorder %s25, 2
      %p179 = por %p177, %p178
      %p181 = scmp.ne.s32.totalorder %s166, %s180
      %p182 = scmp.eq.s32.totalorder %s25, 0
      %p183 = por %p181, %p182
      %s185 = sadd.s32 %s184, 1
      %p188 = scmp.eq.s32.totalorder %s19, 2
      %p189 = scmp.ne.s32.totalorder %s184, %s186
      %p190 = scmp.eq.s32.totalorder %s19, 0
      %p191 = por %p189, %p190
      %p192 = scmp.ne.s32.totalorder %s184, %s186
      %p193 = scmp.eq.s32.totalorder %s24, 2
      %p194 = por %p192, %p193
      %p195 = scmp.ne.s32.totalorder %s186, %s187
      %p196 = scmp.eq.s32.totalorder %s24, 0
      %p197 = por %p195, %p196
      %p198 = scmp.ne.s32.totalorder %s186, %s187
      %p199 = scmp.eq.s32.totalorder %s25, 2
      %p200 = por %p198, %p199
      %p202 = scmp.ne.s32.totalorder %s187, %s201
      %p203 = scmp.eq.s32.totalorder %s25, 0
      %p204 = por %p202, %p203
      %s206 = sadd.s32 %s205, 1
      %p209 = scmp.eq.s32.totalorder %s19, 2
      %p210 = scmp.ne.s32.totalorder %s205, %s207
      %p211 = scmp.eq.s32.totalorder %s19, 0
      %p212 = por %p210, %p211
      %p213 = scmp.ne.s32.totalorder %s205, %s207
      %p214 = scmp.eq.s32.totalorder %s24, 2
      %p215 = por %p213, %p214
      %p216 = scmp.ne.s32.totalorder %s207, %s208
      %p217 = scmp.eq.s32.totalorder %s24, 0
      %p218 = por %p216, %p217
      %p219 = scmp.ne.s32.totalorder %s207, %s208
      %p220 = scmp.eq.s32.totalorder %s25, 2
      %p221 = por %p219, %p220
      %p223 = scmp.ne.s32.totalorder %s208, %s222
      %p224 = scmp.eq.s32.totalorder %s25, 0
      %p225 = por %p223, %p224
      %s227 = sadd.s32 %s226, 1
      %p230 = scmp.eq.s32.totalorder %s19, 2
      %p231 = scmp.ne.s32.totalorder %s226, %s228
      %p232 = scmp.eq.s32.totalorder %s19, 0
      %p233 = por %p231, %p232
      %p234 = scmp.ne.s32.totalorder %s226, %s228
      %p235 = scmp.eq.s32.totalorder %s24, 2
      %p236 = por %p234, %p235
      %p237 = scmp.ne.s32.totalorder %s228, %s229
      %p238 = scmp.eq.s32.totalorder %s24, 0
      %p239 = por %p237, %p238
      %p240 = scmp.ne.s32.totalorder %s228, %s229
      %p241 = scmp.eq.s32.totalorder %s25, 2
      %p242 = por %p240, %p241
      %p244 = scmp.ne.s32.totalorder %s229, %s243
      %p245 = scmp.eq.s32.totalorder %s25, 0
      %p246 = por %p244, %p245
      %s247 = ssub.s32 %s19, %s26
      %p248 = scmp.eq.s32.totalorder %s247, 0
      %s250 = sadd.s32 %s249, 1
      %s251 = scalar_select %p248, %s249, %s250
      %p254 = pneg %p248
      %p255 = scmp.eq.s32.totalorder %s19, 2
      %p256 = por %p254, %p255
      %p257 = scmp.ne.s32.totalorder %s249, %s252
      %p258 = scmp.eq.s32.totalorder %s19, 0
      %p259 = por %p257, %p258
      %p260 = scmp.ne.s32.totalorder %s249, %s252
      %p261 = scmp.eq.s32.totalorder %s24, 2
      %p262 = por %p260, %p261
      %p263 = scmp.ne.s32.totalorder %s252, %s253
      %p264 = scmp.eq.s32.totalorder %s24, 0
      %p265 = por %p263, %p264
      %p266 = scmp.ne.s32.totalorder %s252, %s253
      %p267 = scmp.eq.s32.totalorder %s25, 2
      %p268 = por %p266, %p267
      %p270 = scmp.ne.s32.totalorder %s253, %s269
      %p271 = scmp.eq.s32.totalorder %s25, 0
      %p272 = por %p270, %p271
      %p273 = scmp.le.s32.totalorder 1, %s19
      %p274 = scmp.lt.s32.totalorder %s19, 4
      %p275 = pnand %p273, %p274
      %p276 = pneg %p275
      // Predicated region
      $region9: #{tpu_custom_call.1} parent=5 // pred_check
        _
      $region10: #{tpu_custom_call.1} parent=5 // pred_check_branch
        %278 = sbr.rel (%p275) target = $region12
      $region11: #{tpu_custom_call.1} parent=5 // pred_region
        %s279 = ssub.s32 %s19, 1
        // Predicated region
        $region13: #{tpu_custom_call.1} parent=11 // pred_check
          %p280 = pneg %p92
        $region14: #{tpu_custom_call.1} parent=11 // pred_check_branch
          %282 = sbr.rel (%p280) target = $region16
        $region15: #{tpu_custom_call.1} parent=11 // pred_region
          _
        $region16: #{tpu_custom_call.1} parent=11 // pred_fallthru
          _
        // Predicated region
        $region17: #{tpu_custom_call.1} parent=11 // pred_check
          %p283 = pneg %p113
        $region18: #{tpu_custom_call.1} parent=11 // pred_check_branch
          %285 = sbr.rel (%p283) target = $region20
        $region19: #{tpu_custom_call.1} parent=11 // pred_region
          _
        $region20: #{tpu_custom_call.1} parent=11 // pred_fallthru
          _
        // Predicated region
        $region21: #{tpu_custom_call.1} parent=11 // pred_check
          %p286 = pneg %p134
        $region22: #{tpu_custom_call.1} parent=11 // pred_check_branch
          %288 = sbr.rel (%p286) target = $region24
        $region23: #{tpu_custom_call.1} parent=11 // pred_region
          _
        $region24: #{tpu_custom_call.1} parent=11 // pred_fallthru
          _
        // Predicated region
        $region25: #{tpu_custom_call.1} parent=11 // pred_check
          %p289 = pneg %p155
        $region26: #{tpu_custom_call.1} parent=11 // pred_check_branch
          %291 = sbr.rel (%p289) target = $region28
        $region27: #{tpu_custom_call.1} parent=11 // pred_region
          _
        $region28: #{tpu_custom_call.1} parent=11 // pred_fallthru
          _
        // Predicated region
        $region29: #{tpu_custom_call.1} parent=11 // pred_check
          %p292 = pneg %p176
        $region30: #{tpu_custom_call.1} parent=11 // pred_check_branch
          %294 = sbr.rel (%p292) target = $region32
        $region31: #{tpu_custom_call.1} parent=11 // pred_region
          _
        $region32: #{tpu_custom_call.1} parent=11 // pred_fallthru
          _
        // Predicated region
        $region33: #{tpu_custom_call.1} parent=11 // pred_check
          %p295 = pneg %p197
        $region34: #{tpu_custom_call.1} parent=11 // pred_check_branch
          %297 = sbr.rel (%p295) target = $region36
        $region35: #{tpu_custom_call.1} parent=11 // pred_region
          _
        $region36: #{tpu_custom_call.1} parent=11 // pred_fallthru
          _
        // Predicated region
        $region37: #{tpu_custom_call.1} parent=11 // pred_check
          %p298 = pneg %p218
        $region38: #{tpu_custom_call.1} parent=11 // pred_check_branch
          %300 = sbr.rel (%p298) target = $region40
        $region39: #{tpu_custom_call.1} parent=11 // pred_region
          _
        $region40: #{tpu_custom_call.1} parent=11 // pred_fallthru
          _
        // Predicated region
        $region41: #{tpu_custom_call.1} parent=11 // pred_check
          %p301 = pneg %p239
        $region42: #{tpu_custom_call.1} parent=11 // pred_check_branch
          %303 = sbr.rel (%p301) target = $region44
        $region43: #{tpu_custom_call.1} parent=11 // pred_region
          _
        $region44: #{tpu_custom_call.1} parent=11 // pred_fallthru
          _
      $region12: #{tpu_custom_call.1} parent=5 // pred_fallthru
        _
      %p304 = scmp.lt.s32.totalorder %s19, 3
      // Predicated region
      $region45: #{tpu_custom_call.1} parent=5 // pred_check
        %p305 = pneg %p304
      $region46: #{tpu_custom_call.1} parent=5 // pred_check_branch
        %307 = sbr.rel (%p305) target = $region48
      $region47: #{tpu_custom_call.1} parent=5 // pred_region
        // Predicated region
        $region49: #{tpu_custom_call.1} parent=47 // pred_check
          %p308 = pneg %p39
        $region50: #{tpu_custom_call.1} parent=47 // pred_check_branch
          %310 = sbr.rel (%p308) target = $region52
        $region51: #{tpu_custom_call.1} parent=47 // pred_region
          %s311 = smul.u32 2, %s19
          %p312 = scmp.lt.s32.totalorder %s311, 5
          %s313 = scalar_select %p312, %s311, 5
          %s314 = smul.addr %s313, 4
          %s315 = scalar_lea.vmem %s0, %s314
          %s316 = smul.u32 2, %s19
        $region52: #{tpu_custom_call.1} parent=47 // pred_fallthru
          _
        // Predicated region
        $region53: #{tpu_custom_call.1} parent=47 // pred_check
          %p317 = pneg %p65
        $region54: #{tpu_custom_call.1} parent=47 // pred_check_branch
          %319 = sbr.rel (%p317) target = $region56
        $region55: #{tpu_custom_call.1} parent=47 // pred_region
          %s320 = smul.u32 2, %s19
          %p321 = scmp.lt.s32.totalorder %s320, 5
          %s322 = scalar_select %p321, %s320, 5
          %s323 = smul.addr %s322, 4
          %s324 = scalar_lea.vmem %s1, %s323
          %s325 = smul.u32 2, %s19
        $region56: #{tpu_custom_call.1} parent=47 // pred_fallthru
          _
      $region48: #{tpu_custom_call.1} parent=5 // pred_fallthru
        _
      %p326 = scmp.le.s32.totalorder 1, %s19
      %p327 = scmp.lt.s32.totalorder %s19, 4
      %p328 = pnand %p326, %p327
      %p329 = pneg %p328
      // Predicated region
      $region57: #{tpu_custom_call.1} parent=5 // pred_check
        _
      $region58: #{tpu_custom_call.1} parent=5 // pred_check_branch
        %331 = sbr.rel (%p328) target = $region60
      $region59: #{tpu_custom_call.1} parent=5 // pred_region
        %s332 = ssub.s32 %s19, 1
        %s333 = smul.u32 2, %s24
        %p334 = scmp.lt.s32.totalorder %s333, 5
        %s335 = scalar_select %p334, %s333, 5
        %s336 = smul.addr %s335, 4
        %s337 = scalar_lea.vmem %s0, %s336
        %p338 = pneg %p45
        %p339 = pneg %p42
        %s340 = smul.u32 2, %s24
        %p341 = scmp.lt.s32.totalorder %s340, 5
        %s342 = scalar_select %p341, %s340, 5
        %s343 = smul.addr %s342, 4
        %s344 = scalar_lea.vmem %s1, %s343
        %p345 = pneg %p71
        %p346 = pneg %p68
        %p347 = pneg %p92
        %p348 = pneg %p89
        %p349 = pneg %p113
        %p350 = pneg %p110
        %p351 = pneg %p134
        %p352 = pneg %p131
        %p353 = pneg %p155
        %p354 = pneg %p152
        %p355 = pneg %p176
        %p356 = pneg %p173
        %p357 = pneg %p197
        %p358 = pneg %p194
        %p359 = pneg %p218
        %p360 = pneg %p215
        %p361 = pneg %p239
        %p362 = pneg %p236
        %p363 = pneg %p265
        %p364 = pneg %p262
        %s365 = sand.u32 %s252, 1
        %s366 = scalar_lea.sflag [#allocation3], %s365
        %s367 = sand.u32 %s252, 1
        %s368 = smul.addr %s367, 16
        %s369 = scalar_lea.vmem [#allocation2], %s368
        %s370 = smul.u32 2, %s24
        %p371 = scmp.lt.s32.totalorder %s370, 5
        %s372 = scalar_select %p371, %s370, 5
        %s373 = smul.addr %s372, 4
        %s374 = scalar_lea.vmem %s0, %s373
        %s375 = smul.u32 2, %s24
        %s376 = smul.u32 2, %s24
        %p377 = scmp.lt.s32.totalorder %s376, 5
        %s378 = scalar_select %p377, %s376, 5
        %s379 = smul.addr %s378, 4
        %s380 = scalar_lea.vmem %s1, %s379
        %s381 = smul.u32 2, %s24
        %s382 = smul.u32 2, %s24
        %v383 = vld [vmem:[%s374] sm:$0xff]
        %v384 = vld [vmem:[%s380] sm:$0xff]
        %v385 = vld [vmem:[%s2] sm:$0xff]
        %v386 = vld [vmem:[%s2 + $0x8] sm:$0xff]
        %v387 = vld [vmem:[%s2 + $0x10] sm:$0xff]
        %v388 = vld [vmem:[%s2 + $0x18] sm:$0xff]
        %v389 = vld [vmem:[%s2 + $0x20] sm:$0xff]
        %v390 = vld [vmem:[%s2 + $0x28] sm:$0xff]
        %v391 = vld [vmem:[%s2 + $0x30] sm:$0xff]
        %v392 = vld [vmem:[%s2 + $0x38] sm:$0xff]
        %v393 = vld [vmem:[%s3] sm:$0xff]
        %v394 = vld [vmem:[%s3 + $0x8] sm:$0xff]
        %v395 = vld [vmem:[%s3 + $0x10] sm:$0xff]
        %v396 = vld [vmem:[%s3 + $0x18] sm:$0xff]
        %v397 = vld [vmem:[%s3 + $0x20] sm:$0xff]
        %v398 = vld [vmem:[%s3 + $0x28] sm:$0xff]
        %v399 = vld [vmem:[%s3 + $0x30] sm:$0xff]
        %v400 = vld [vmem:[%s3 + $0x38] sm:$0xff]
        %402 = vset.pattern.permute.xlu0 0
        %403 = vperm.xlu0 %402, %v393
        %v404 = vpop.permute.xlu0 %403
        %407 = vset.pattern.permute.xlu0 0
        %408 = vperm.xlu0 %407, %v394
        %v409 = vpop.permute.xlu0 %408
        %412 = vset.pattern.permute.xlu0 0
        %413 = vperm.xlu0 %412, %v395
        %v414 = vpop.permute.xlu0 %413
        %417 = vset.pattern.permute.xlu0 0
        %418 = vperm.xlu0 %417, %v396
        %v419 = vpop.permute.xlu0 %418
        %422 = vset.pattern.permute.xlu0 0
        %423 = vperm.xlu0 %422, %v397
        %v424 = vpop.permute.xlu0 %423
        %427 = vset.pattern.permute.xlu0 0
        %428 = vperm.xlu0 %427, %v398
        %v429 = vpop.permute.xlu0 %428
        %432 = vset.pattern.permute.xlu0 0
        %433 = vperm.xlu0 %432, %v399
        %v434 = vpop.permute.xlu0 %433
        %437 = vset.pattern.permute.xlu0 0
        %438 = vperm.xlu0 %437, %v400
        %v439 = vpop.permute.xlu0 %438
        %442 = vst [vmem:[#allocation1] ss:$2 sm:$0xff] %v384
        %v443 = vld.sshfl [vmem:[#allocation1] sm:$0xff pattern:$0x75316420]
        %v444 = vld.sshfl [vmem:[#allocation1 + $0x8] sm:$0xff pattern:$0x75316420]
        %vm445 = vcmask 31744
        %v447 = vsel %vm445, %v385, 0
        %v450 = vsel %vm445, %v386, 0
        %v453 = vsel %vm445, %v387, 0
        %v456 = vsel %vm445, %v388, 0
        %v459 = vsel %vm445, %v389, 0
        %v462 = vsel %vm445, %v390, 0
        %v465 = vsel %vm445, %v391, 0
        %v468 = vsel %vm445, %v392, 0
        %vm470 = vcmask 1043456
        %v471 = vsel %vm470, %v443, 0
        %v473 = vsel %vm470, %v444, 0
        %475 = vmatpush.msra.mxu0 0.0
        %476 = vmatpush.msra.mxu0 0.0
        %477 = vmatpush.msra.mxu0 0.0
        %478 = vmatpush.msra.mxu0 0.0
        %479 = vmatpush.msra.mxu0 0.0
        %480 = vmatpush.msra.mxu0 0.0
        %481 = vmatpush.msra.mxu0 0.0
        %482 = vmatpush.msra.mxu0 0.0
        %483 = vmatpush.msra.mxu0 0.0
        %484 = vmatpush.msra.mxu0 0.0
        %485 = vmatpush.msra.mxu0 0.0
        %486 = vmatpush.msra.mxu0 0.0
        %487 = vmatpush.msra.mxu0 0.0
        %488 = vmatpush.msra.mxu0 0.0
        %489 = vmatpush.msra.mxu0 0.0
        %490 = vmatpush.msra.mxu0 %v471
        %491 = vmatmul.f32.gmra.mxu0 %v447
        %v492 = vpop.f32.mrf.mxu0
        %v493 = vadd.f32 %v404, %v492
        %494 = vmatmul.f32.gmra.mxu0 %v450
        %v495 = vpop.f32.mrf.mxu0
        %v496 = vadd.f32 %v409, %v495
        %497 = vmatmul.f32.gmra.mxu0 %v453
        %v498 = vpop.f32.mrf.mxu0
        %v499 = vadd.f32 %v414, %v498
        %500 = vmatmul.f32.gmra.mxu0 %v456
        %v501 = vpop.f32.mrf.mxu0
        %v502 = vadd.f32 %v419, %v501
        %503 = vmatmul.f32.gmra.mxu0 %v459
        %v504 = vpop.f32.mrf.mxu0
        %v505 = vadd.f32 %v424, %v504
        %506 = vmatmul.f32.gmra.mxu0 %v462
        %v507 = vpop.f32.mrf.mxu0
        %v508 = vadd.f32 %v429, %v507
        %509 = vmatmul.f32.gmra.mxu0 %v465
        %v510 = vpop.f32.mrf.mxu0
        %v511 = vadd.f32 %v434, %v510
        %512 = vmatmul.f32.gmra.mxu0 %v468
        %v513 = vpop.f32.mrf.mxu0
        %v514 = vadd.f32 %v439, %v513
        %515 = vdwg.mxu0
        %516 = vmatpush.msra.mxu0 0.0
        %517 = vmatpush.msra.mxu0 0.0
        %518 = vmatpush.msra.mxu0 0.0
        %519 = vmatpush.msra.mxu0 0.0
        %520 = vmatpush.msra.mxu0 0.0
        %521 = vmatpush.msra.mxu0 0.0
        %522 = vmatpush.msra.mxu0 0.0
        %523 = vmatpush.msra.mxu0 0.0
        %524 = vmatpush.msra.mxu0 0.0
        %525 = vmatpush.msra.mxu0 0.0
        %526 = vmatpush.msra.mxu0 0.0
        %527 = vmatpush.msra.mxu0 0.0
        %528 = vmatpush.msra.mxu0 0.0
        %529 = vmatpush.msra.mxu0 0.0
        %530 = vmatpush.msra.mxu0 0.0
        %531 = vmatpush.msra.mxu0 %v473
        %532 = vmatmul.f32.gmra.mxu0 %v447
        %v533 = vpop.f32.mrf.mxu0
        %v534 = vadd.f32 %v404, %v533
        %535 = vmatmul.f32.gmra.mxu0 %v450
        %v536 = vpop.f32.mrf.mxu0
        %v537 = vadd.f32 %v409, %v536
        %538 = vmatmul.f32.gmra.mxu0 %v453
        %v539 = vpop.f32.mrf.mxu0
        %v540 = vadd.f32 %v414, %v539
        %541 = vmatmul.f32.gmra.mxu0 %v456
        %v542 = vpop.f32.mrf.mxu0
        %v543 = vadd.f32 %v419, %v542
        %544 = vmatmul.f32.gmra.mxu0 %v459
        %v545 = vpop.f32.mrf.mxu0
        %v546 = vadd.f32 %v424, %v545
        %547 = vmatmul.f32.gmra.mxu0 %v462
        %v548 = vpop.f32.mrf.mxu0
        %v549 = vadd.f32 %v429, %v548
        %550 = vmatmul.f32.gmra.mxu0 %v465
        %v551 = vpop.f32.mrf.mxu0
        %v552 = vadd.f32 %v434, %v551
        %553 = vmatmul.f32.gmra.mxu0 %v468
        %v554 = vpop.f32.mrf.mxu0
        %v555 = vadd.f32 %v439, %v554
        %556 = vdwg.mxu0
        %v557 = vmul.f32 %v493, 0.5
        %v558 = vmul.f32 %v534, 0.5
        %v559 = vmul.f32 %v496, 0.5
        %v560 = vmul.f32 %v537, 0.5
        %v561 = vmul.f32 %v499, 0.5
        %v562 = vmul.f32 %v540, 0.5
        %v563 = vmul.f32 %v502, 0.5
        %v564 = vmul.f32 %v543, 0.5
        %v565 = vmul.f32 %v505, 0.5
        %v566 = vmul.f32 %v546, 0.5
        %v567 = vmul.f32 %v508, 0.5
        %v568 = vmul.f32 %v549, 0.5
        %v569 = vmul.f32 %v511, 0.5
        %v570 = vmul.f32 %v552, 0.5
        %v571 = vmul.f32 %v514, 0.5
        %v572 = vmul.f32 %v555, 0.5
        %v573 = vtanh.pop %v557
        %v574 = vtanh.pop %v558
        %v575 = vtanh.pop %v559
        %v576 = vtanh.pop %v560
        %v577 = vtanh.pop %v561
        %v578 = vtanh.pop %v562
        %v579 = vtanh.pop %v563
        %v580 = vtanh.pop %v564
        %v581 = vtanh.pop %v565
        %v582 = vtanh.pop %v566
        %v583 = vtanh.pop %v567
        %v584 = vtanh.pop %v568
        %v585 = vtanh.pop %v569
        %v586 = vtanh.pop %v570
        %v587 = vtanh.pop %v571
        %v588 = vtanh.pop %v572
        %v589 = vadd.f32 %v573, 1.0
        %v590 = vadd.f32 %v574, 1.0
        %v591 = vadd.f32 %v575, 1.0
        %v592 = vadd.f32 %v576, 1.0
        %v593 = vadd.f32 %v577, 1.0
        %v594 = vadd.f32 %v578, 1.0
        %v595 = vadd.f32 %v579, 1.0
        %v596 = vadd.f32 %v580, 1.0
        %v597 = vadd.f32 %v581, 1.0
        %v598 = vadd.f32 %v582, 1.0
        %v599 = vadd.f32 %v583, 1.0
        %v600 = vadd.f32 %v584, 1.0
        %v601 = vadd.f32 %v585, 1.0
        %v602 = vadd.f32 %v586, 1.0
        %v603 = vadd.f32 %v587, 1.0
        %v604 = vadd.f32 %v588, 1.0
        %v605 = vmul.f32 %v589, 0.5
        %v606 = vmul.f32 %v590, 0.5
        %v607 = vmul.f32 %v591, 0.5
        %v608 = vmul.f32 %v592, 0.5
        %v609 = vmul.f32 %v593, 0.5
        %v610 = vmul.f32 %v594, 0.5
        %v611 = vmul.f32 %v595, 0.5
        %v612 = vmul.f32 %v596, 0.5
        %v613 = vmul.f32 %v597, 0.5
        %v614 = vmul.f32 %v598, 0.5
        %v615 = vmul.f32 %v599, 0.5
        %v616 = vmul.f32 %v600, 0.5
        %v617 = vmul.f32 %v601, 0.5
        %v618 = vmul.f32 %v602, 0.5
        %v619 = vmul.f32 %v603, 0.5
        %v620 = vmul.f32 %v604, 0.5
        %v621 = vld [vmem:[%s4] sm:$0xff]
        %v622 = vld [vmem:[%s4 + $0x8] sm:$0xff]
        %v623 = vld [vmem:[%s4 + $0x10] sm:$0xff]
        %v624 = vld [vmem:[%s4 + $0x18] sm:$0xff]
        %v625 = vld [vmem:[%s4 + $0x20] sm:$0xff]
        %v626 = vld [vmem:[%s4 + $0x28] sm:$0xff]
        %v627 = vld [vmem:[%s4 + $0x30] sm:$0xff]
        %v628 = vld [vmem:[%s4 + $0x38] sm:$0xff]
        %v629 = vld [vmem:[%s5] sm:$0xff]
        %v630 = vld [vmem:[%s5 + $0x8] sm:$0xff]
        %v631 = vld [vmem:[%s5 + $0x10] sm:$0xff]
        %v632 = vld [vmem:[%s5 + $0x18] sm:$0xff]
        %v633 = vld [vmem:[%s5 + $0x20] sm:$0xff]
        %v634 = vld [vmem:[%s5 + $0x28] sm:$0xff]
        %v635 = vld [vmem:[%s5 + $0x30] sm:$0xff]
        %v636 = vld [vmem:[%s5 + $0x38] sm:$0xff]
        %638 = vset.pattern.permute.xlu0 0
        %639 = vperm.xlu0 %638, %v629
        %v640 = vpop.permute.xlu0 %639
        %643 = vset.pattern.permute.xlu0 0
        %644 = vperm.xlu0 %643, %v630
        %v645 = vpop.permute.xlu0 %644
        %648 = vset.pattern.permute.xlu0 0
        %649 = vperm.xlu0 %648, %v631
        %v650 = vpop.permute.xlu0 %649
        %653 = vset.pattern.permute.xlu0 0
        %654 = vperm.xlu0 %653, %v632
        %v655 = vpop.permute.xlu0 %654
        %658 = vset.pattern.permute.xlu0 0
        %659 = vperm.xlu0 %658, %v633
        %v660 = vpop.permute.xlu0 %659
        %663 = vset.pattern.permute.xlu0 0
        %664 = vperm.xlu0 %663, %v634
        %v665 = vpop.permute.xlu0 %664
        %668 = vset.pattern.permute.xlu0 0
        %669 = vperm.xlu0 %668, %v635
        %v670 = vpop.permute.xlu0 %669
        %673 = vset.pattern.permute.xlu0 0
        %674 = vperm.xlu0 %673, %v636
        %v675 = vpop.permute.xlu0 %674
        %vm677 = vcmask 523264
        %v679 = vsel %vm677, %v621, 0
        %v682 = vsel %vm677, %v622, 0
        %v685 = vsel %vm677, %v623, 0
        %v688 = vsel %vm677, %v624, 0
        %v691 = vsel %vm677, %v625, 0
        %v694 = vsel %vm677, %v626, 0
        %v697 = vsel %vm677, %v627, 0
        %v700 = vsel %vm677, %v628, 0
        %702 = vmatpush.msra.mxu0 0.0
        %703 = vmatpush.msra.mxu0 0.0
        %704 = vmatpush.msra.mxu0 0.0
        %705 = vmatpush.msra.mxu0 0.0
        %706 = vmatpush.msra.mxu0 0.0
        %707 = vmatpush.msra.mxu0 0.0
        %708 = vmatpush.msra.mxu0 0.0
        %709 = vmatpush.msra.mxu0 0.0
        %710 = vmatpush.msra.mxu0 %v619
        %711 = vmatpush.msra.mxu0 %v617
        %712 = vmatpush.msra.mxu0 %v615
        %713 = vmatpush.msra.mxu0 %v613
        %714 = vmatpush.msra.mxu0 %v611
        %715 = vmatpush.msra.mxu0 %v609
        %716 = vmatpush.msra.mxu0 %v607
        %717 = vmatpush.msra.mxu0 %v605
        %718 = vmatmul.f32.gmra.mxu0 %v679
        %v719 = vpop.f32.mrf.mxu0
        %v720 = vadd.f32 %v640, %v719
        %721 = vmatmul.f32.gmra.mxu0 %v682
        %v722 = vpop.f32.mrf.mxu0
        %v723 = vadd.f32 %v645, %v722
        %724 = vmatmul.f32.gmra.mxu0 %v685
        %v725 = vpop.f32.mrf.mxu0
        %v726 = vadd.f32 %v650, %v725
        %727 = vmatmul.f32.gmra.mxu0 %v688
        %v728 = vpop.f32.mrf.mxu0
        %v729 = vadd.f32 %v655, %v728
        %730 = vmatmul.f32.gmra.mxu0 %v691
        %v731 = vpop.f32.mrf.mxu0
        %v732 = vadd.f32 %v660, %v731
        %733 = vmatmul.f32.gmra.mxu0 %v694
        %v734 = vpop.f32.mrf.mxu0
        %v735 = vadd.f32 %v665, %v734
        %736 = vmatmul.f32.gmra.mxu0 %v697
        %v737 = vpop.f32.mrf.mxu0
        %v738 = vadd.f32 %v670, %v737
        %739 = vmatmul.f32.gmra.mxu0 %v700
        %v740 = vpop.f32.mrf.mxu0
        %v741 = vadd.f32 %v675, %v740
        %742 = vdwg.mxu0
        %743 = vmatpush.msra.mxu0 0.0
        %744 = vmatpush.msra.mxu0 0.0
        %745 = vmatpush.msra.mxu0 0.0
        %746 = vmatpush.msra.mxu0 0.0
        %747 = vmatpush.msra.mxu0 0.0
        %748 = vmatpush.msra.mxu0 0.0
        %749 = vmatpush.msra.mxu0 0.0
        %750 = vmatpush.msra.mxu0 0.0
        %751 = vmatpush.msra.mxu0 %v620
        %752 = vmatpush.msra.mxu0 %v618
        %753 = vmatpush.msra.mxu0 %v616
        %754 = vmatpush.msra.mxu0 %v614
        %755 = vmatpush.msra.mxu0 %v612
        %756 = vmatpush.msra.mxu0 %v610
        %757 = vmatpush.msra.mxu0 %v608
        %758 = vmatpush.msra.mxu0 %v606
        %759 = vmatmul.f32.gmra.mxu0 %v679
        %v760 = vpop.f32.mrf.mxu0
        %v761 = vadd.f32 %v640, %v760
        %762 = vmatmul.f32.gmra.mxu0 %v682
        %v763 = vpop.f32.mrf.mxu0
        %v764 = vadd.f32 %v645, %v763
        %765 = vmatmul.f32.gmra.mxu0 %v685
        %v766 = vpop.f32.mrf.mxu0
        %v767 = vadd.f32 %v650, %v766
        %768 = vmatmul.f32.gmra.mxu0 %v688
        %v769 = vpop.f32.mrf.mxu0
        %v770 = vadd.f32 %v655, %v769
        %771 = vmatmul.f32.gmra.mxu0 %v691
        %v772 = vpop.f32.mrf.mxu0
        %v773 = vadd.f32 %v660, %v772
        %774 = vmatmul.f32.gmra.mxu0 %v694
        %v775 = vpop.f32.mrf.mxu0
        %v776 = vadd.f32 %v665, %v775
        %777 = vmatmul.f32.gmra.mxu0 %v697
        %v778 = vpop.f32.mrf.mxu0
        %v779 = vadd.f32 %v670, %v778
        %780 = vmatmul.f32.gmra.mxu0 %v700
        %v781 = vpop.f32.mrf.mxu0
        %v782 = vadd.f32 %v675, %v781
        %783 = vdwg.mxu0
        %v784 = vmul.f32 %v720, 0.5
        %v785 = vmul.f32 %v761, 0.5
        %v786 = vmul.f32 %v723, 0.5
        %v787 = vmul.f32 %v764, 0.5
        %v788 = vmul.f32 %v726, 0.5
        %v789 = vmul.f32 %v767, 0.5
        %v790 = vmul.f32 %v729, 0.5
        %v791 = vmul.f32 %v770, 0.5
        %v792 = vmul.f32 %v732, 0.5
        %v793 = vmul.f32 %v773, 0.5
        %v794 = vmul.f32 %v735, 0.5
        %v795 = vmul.f32 %v776, 0.5
        %v796 = vmul.f32 %v738, 0.5
        %v797 = vmul.f32 %v779, 0.5
        %v798 = vmul.f32 %v741, 0.5
        %v799 = vmul.f32 %v782, 0.5
        %v800 = vtanh.pop %v784
        %v801 = vtanh.pop %v785
        %v802 = vtanh.pop %v786
        %v803 = vtanh.pop %v787
        %v804 = vtanh.pop %v788
        %v805 = vtanh.pop %v789
        %v806 = vtanh.pop %v790
        %v807 = vtanh.pop %v791
        %v808 = vtanh.pop %v792
        %v809 = vtanh.pop %v793
        %v810 = vtanh.pop %v794
        %v811 = vtanh.pop %v795
        %v812 = vtanh.pop %v796
        %v813 = vtanh.pop %v797
        %v814 = vtanh.pop %v798
        %v815 = vtanh.pop %v799
        %v816 = vadd.f32 %v800, 1.0
        %v817 = vadd.f32 %v801, 1.0
        %v818 = vadd.f32 %v802, 1.0
        %v819 = vadd.f32 %v803, 1.0
        %v820 = vadd.f32 %v804, 1.0
        %v821 = vadd.f32 %v805, 1.0
        %v822 = vadd.f32 %v806, 1.0
        %v823 = vadd.f32 %v807, 1.0
        %v824 = vadd.f32 %v808, 1.0
        %v825 = vadd.f32 %v809, 1.0
        %v826 = vadd.f32 %v810, 1.0
        %v827 = vadd.f32 %v811, 1.0
        %v828 = vadd.f32 %v812, 1.0
        %v829 = vadd.f32 %v813, 1.0
        %v830 = vadd.f32 %v814, 1.0
        %v831 = vadd.f32 %v815, 1.0
        %v832 = vmul.f32 %v816, 0.5
        %v833 = vmul.f32 %v817, 0.5
        %v834 = vmul.f32 %v818, 0.5
        %v835 = vmul.f32 %v819, 0.5
        %v836 = vmul.f32 %v820, 0.5
        %v837 = vmul.f32 %v821, 0.5
        %v838 = vmul.f32 %v822, 0.5
        %v839 = vmul.f32 %v823, 0.5
        %v840 = vmul.f32 %v824, 0.5
        %v841 = vmul.f32 %v825, 0.5
        %v842 = vmul.f32 %v826, 0.5
        %v843 = vmul.f32 %v827, 0.5
        %v844 = vmul.f32 %v828, 0.5
        %v845 = vmul.f32 %v829, 0.5
        %v846 = vmul.f32 %v830, 0.5
        %v847 = vmul.f32 %v831, 0.5
        %v848 = vld [vmem:[%s6] sm:$0xff]
        %v849 = vld [vmem:[%s6 + $0x8] sm:$0xff]
        %v850 = vld [vmem:[%s6 + $0x10] sm:$0xff]
        %v851 = vld [vmem:[%s6 + $0x18] sm:$0xff]
        %v852 = vld [vmem:[%s6 + $0x20] sm:$0xff]
        %v853 = vld [vmem:[%s6 + $0x28] sm:$0xff]
        %v854 = vld [vmem:[%s6 + $0x30] sm:$0xff]
        %v855 = vld [vmem:[%s6 + $0x38] sm:$0xff]
        %v856 = vld [vmem:[%s7] sm:$0xff]
        %v857 = vld [vmem:[%s7 + $0x8] sm:$0xff]
        %v858 = vld [vmem:[%s7 + $0x10] sm:$0xff]
        %v859 = vld [vmem:[%s7 + $0x18] sm:$0xff]
        %v860 = vld [vmem:[%s7 + $0x20] sm:$0xff]
        %v861 = vld [vmem:[%s7 + $0x28] sm:$0xff]
        %v862 = vld [vmem:[%s7 + $0x30] sm:$0xff]
        %v863 = vld [vmem:[%s7 + $0x38] sm:$0xff]
        %865 = vset.pattern.permute.xlu0 0
        %866 = vperm.xlu0 %865, %v856
        %v867 = vpop.permute.xlu0 %866
        %870 = vset.pattern.permute.xlu0 0
        %871 = vperm.xlu0 %870, %v857
        %v872 = vpop.permute.xlu0 %871
        %875 = vset.pattern.permute.xlu0 0
        %876 = vperm.xlu0 %875, %v858
        %v877 = vpop.permute.xlu0 %876
        %880 = vset.pattern.permute.xlu0 0
        %881 = vperm.xlu0 %880, %v859
        %v882 = vpop.permute.xlu0 %881
        %885 = vset.pattern.permute.xlu0 0
        %886 = vperm.xlu0 %885, %v860
        %v887 = vpop.permute.xlu0 %886
        %890 = vset.pattern.permute.xlu0 0
        %891 = vperm.xlu0 %890, %v861
        %v892 = vpop.permute.xlu0 %891
        %895 = vset.pattern.permute.xlu0 0
        %896 = vperm.xlu0 %895, %v862
        %v897 = vpop.permute.xlu0 %896
        %900 = vset.pattern.permute.xlu0 0
        %901 = vperm.xlu0 %900, %v863
        %v902 = vpop.permute.xlu0 %901
        %v905 = vsel %vm677, %v848, 0
        %v908 = vsel %vm677, %v849, 0
        %v911 = vsel %vm677, %v850, 0
        %v914 = vsel %vm677, %v851, 0
        %v917 = vsel %vm677, %v852, 0
        %v920 = vsel %vm677, %v853, 0
        %v923 = vsel %vm677, %v854, 0
        %v926 = vsel %vm677, %v855, 0
        %928 = vmatpush.msra.mxu0 0.0
        %929 = vmatpush.msra.mxu0 0.0
        %930 = vmatpush.msra.mxu0 0.0
        %931 = vmatpush.msra.mxu0 0.0
        %932 = vmatpush.msra.mxu0 0.0
        %933 = vmatpush.msra.mxu0 0.0
        %934 = vmatpush.msra.mxu0 0.0
        %935 = vmatpush.msra.mxu0 0.0
        %936 = vmatpush.msra.mxu0 %v846
        %937 = vmatpush.msra.mxu0 %v844
        %938 = vmatpush.msra.mxu0 %v842
        %939 = vmatpush.msra.mxu0 %v840
        %940 = vmatpush.msra.mxu0 %v838
        %941 = vmatpush.msra.mxu0 %v836
        %942 = vmatpush.msra.mxu0 %v834
        %943 = vmatpush.msra.mxu0 %v832
        %944 = vmatmul.f32.gmra.mxu0 %v905
        %v945 = vpop.f32.mrf.mxu0
        %v946 = vadd.f32 %v867, %v945
        %947 = vmatmul.f32.gmra.mxu0 %v908
        %v948 = vpop.f32.mrf.mxu0
        %v949 = vadd.f32 %v872, %v948
        %950 = vmatmul.f32.gmra.mxu0 %v911
        %v951 = vpop.f32.mrf.mxu0
        %v952 = vadd.f32 %v877, %v951
        %953 = vmatmul.f32.gmra.mxu0 %v914
        %v954 = vpop.f32.mrf.mxu0
        %v955 = vadd.f32 %v882, %v954
        %956 = vmatmul.f32.gmra.mxu0 %v917
        %v957 = vpop.f32.mrf.mxu0
        %v958 = vadd.f32 %v887, %v957
        %959 = vmatmul.f32.gmra.mxu0 %v920
        %v960 = vpop.f32.mrf.mxu0
        %v961 = vadd.f32 %v892, %v960
        %962 = vmatmul.f32.gmra.mxu0 %v923
        %v963 = vpop.f32.mrf.mxu0
        %v964 = vadd.f32 %v897, %v963
        %965 = vmatmul.f32.gmra.mxu0 %v926
        %v966 = vpop.f32.mrf.mxu0
        %v967 = vadd.f32 %v902, %v966
        %968 = vdwg.mxu0
        %969 = vmatpush.msra.mxu0 0.0
        %970 = vmatpush.msra.mxu0 0.0
        %971 = vmatpush.msra.mxu0 0.0
        %972 = vmatpush.msra.mxu0 0.0
        %973 = vmatpush.msra.mxu0 0.0
        %974 = vmatpush.msra.mxu0 0.0
        %975 = vmatpush.msra.mxu0 0.0
        %976 = vmatpush.msra.mxu0 0.0
        %977 = vmatpush.msra.mxu0 %v847
        %978 = vmatpush.msra.mxu0 %v845
        %979 = vmatpush.msra.mxu0 %v843
        %980 = vmatpush.msra.mxu0 %v841
        %981 = vmatpush.msra.mxu0 %v839
        %982 = vmatpush.msra.mxu0 %v837
        %983 = vmatpush.msra.mxu0 %v835
        %984 = vmatpush.msra.mxu0 %v833
        %985 = vmatmul.f32.gmra.mxu0 %v905
        %v986 = vpop.f32.mrf.mxu0
        %v987 = vadd.f32 %v867, %v986
        %988 = vmatmul.f32.gmra.mxu0 %v908
        %v989 = vpop.f32.mrf.mxu0
        %v990 = vadd.f32 %v872, %v989
        %991 = vmatmul.f32.gmra.mxu0 %v911
        %v992 = vpop.f32.mrf.mxu0
        %v993 = vadd.f32 %v877, %v992
        %994 = vmatmul.f32.gmra.mxu0 %v914
        %v995 = vpop.f32.mrf.mxu0
        %v996 = vadd.f32 %v882, %v995
        %997 = vmatmul.f32.gmra.mxu0 %v917
        %v998 = vpop.f32.mrf.mxu0
        %v999 = vadd.f32 %v887, %v998
        %1000 = vmatmul.f32.gmra.mxu0 %v920
        %v1001 = vpop.f32.mrf.mxu0
        %v1002 = vadd.f32 %v892, %v1001
        %1003 = vmatmul.f32.gmra.mxu0 %v923
        %v1004 = vpop.f32.mrf.mxu0
        %v1005 = vadd.f32 %v897, %v1004
        %1006 = vmatmul.f32.gmra.mxu0 %v926
        %v1007 = vpop.f32.mrf.mxu0
        %v1008 = vadd.f32 %v902, %v1007
        %1009 = vdwg.mxu0
        %v1010 = vmul.f32 %v946, 0.5
        %v1011 = vmul.f32 %v987, 0.5
        %v1012 = vmul.f32 %v949, 0.5
        %v1013 = vmul.f32 %v990, 0.5
        %v1014 = vmul.f32 %v952, 0.5
        %v1015 = vmul.f32 %v993, 0.5
        %v1016 = vmul.f32 %v955, 0.5
        %v1017 = vmul.f32 %v996, 0.5
        %v1018 = vmul.f32 %v958, 0.5
        %v1019 = vmul.f32 %v999, 0.5
        %v1020 = vmul.f32 %v961, 0.5
        %v1021 = vmul.f32 %v1002, 0.5
        %v1022 = vmul.f32 %v964, 0.5
        %v1023 = vmul.f32 %v1005, 0.5
        %v1024 = vmul.f32 %v967, 0.5
        %v1025 = vmul.f32 %v1008, 0.5
        %v1026 = vtanh.pop %v1010
        %v1027 = vtanh.pop %v1011
        %v1028 = vtanh.pop %v1012
        %v1029 = vtanh.pop %v1013
        %v1030 = vtanh.pop %v1014
        %v1031 = vtanh.pop %v1015
        %v1032 = vtanh.pop %v1016
        %v1033 = vtanh.pop %v1017
        %v1034 = vtanh.pop %v1018
        %v1035 = vtanh.pop %v1019
        %v1036 = vtanh.pop %v1020
        %v1037 = vtanh.pop %v1021
        %v1038 = vtanh.pop %v1022
        %v1039 = vtanh.pop %v1023
        %v1040 = vtanh.pop %v1024
        %v1041 = vtanh.pop %v1025
        %v1042 = vadd.f32 %v1026, 1.0
        %v1043 = vadd.f32 %v1027, 1.0
        %v1044 = vadd.f32 %v1028, 1.0
        %v1045 = vadd.f32 %v1029, 1.0
        %v1046 = vadd.f32 %v1030, 1.0
        %v1047 = vadd.f32 %v1031, 1.0
        %v1048 = vadd.f32 %v1032, 1.0
        %v1049 = vadd.f32 %v1033, 1.0
        %v1050 = vadd.f32 %v1034, 1.0
        %v1051 = vadd.f32 %v1035, 1.0
        %v1052 = vadd.f32 %v1036, 1.0
        %v1053 = vadd.f32 %v1037, 1.0
        %v1054 = vadd.f32 %v1038, 1.0
        %v1055 = vadd.f32 %v1039, 1.0
        %v1056 = vadd.f32 %v1040, 1.0
        %v1057 = vadd.f32 %v1041, 1.0
        %v1058 = vmul.f32 %v1042, 0.5
        %v1059 = vmul.f32 %v1043, 0.5
        %v1060 = vmul.f32 %v1044, 0.5
        %v1061 = vmul.f32 %v1045, 0.5
        %v1062 = vmul.f32 %v1046, 0.5
        %v1063 = vmul.f32 %v1047, 0.5
        %v1064 = vmul.f32 %v1048, 0.5
        %v1065 = vmul.f32 %v1049, 0.5
        %v1066 = vmul.f32 %v1050, 0.5
        %v1067 = vmul.f32 %v1051, 0.5
        %v1068 = vmul.f32 %v1052, 0.5
        %v1069 = vmul.f32 %v1053, 0.5
        %v1070 = vmul.f32 %v1054, 0.5
        %v1071 = vmul.f32 %v1055, 0.5
        %v1072 = vmul.f32 %v1056, 0.5
        %v1073 = vmul.f32 %v1057, 0.5
        %v1074 = vld [vmem:[%s8] sm:$0xff]
        %v1075 = vld [vmem:[%s9] sm:$0xff]
        %1077 = vset.pattern.permute.xlu0 0
        %1078 = vperm.xlu0 %1077, %v1075
        %v1079 = vpop.permute.xlu0 %1078
        %v1082 = vsel %vm677, %v1074, 0
        %1084 = vmatpush.msra.mxu0 0.0
        %1085 = vmatpush.msra.mxu0 0.0
        %1086 = vmatpush.msra.mxu0 0.0
        %1087 = vmatpush.msra.mxu0 0.0
        %1088 = vmatpush.msra.mxu0 0.0
        %1089 = vmatpush.msra.mxu0 0.0
        %1090 = vmatpush.msra.mxu0 0.0
        %1091 = vmatpush.msra.mxu0 0.0
        %1092 = vmatpush.msra.mxu0 %v1072
        %1093 = vmatpush.msra.mxu0 %v1070
        %1094 = vmatpush.msra.mxu0 %v1068
        %1095 = vmatpush.msra.mxu0 %v1066
        %1096 = vmatpush.msra.mxu0 %v1064
        %1097 = vmatpush.msra.mxu0 %v1062
        %1098 = vmatpush.msra.mxu0 %v1060
        %1099 = vmatpush.msra.mxu0 %v1058
        %1100 = vmatmul.f32.gmra.mxu0 %v1082
        %v1101 = vpop.f32.mrf.mxu0
        %v1102 = vadd.f32 %v1079, %v1101
        %1103 = vdwg.mxu0
        %1104 = vmatpush.msra.mxu0 0.0
        %1105 = vmatpush.msra.mxu0 0.0
        %1106 = vmatpush.msra.mxu0 0.0
        %1107 = vmatpush.msra.mxu0 0.0
        %1108 = vmatpush.msra.mxu0 0.0
        %1109 = vmatpush.msra.mxu0 0.0
        %1110 = vmatpush.msra.mxu0 0.0
        %1111 = vmatpush.msra.mxu0 0.0
        %1112 = vmatpush.msra.mxu0 %v1073
        %1113 = vmatpush.msra.mxu0 %v1071
        %1114 = vmatpush.msra.mxu0 %v1069
        %1115 = vmatpush.msra.mxu0 %v1067
        %1116 = vmatpush.msra.mxu0 %v1065
        %1117 = vmatpush.msra.mxu0 %v1063
        %1118 = vmatpush.msra.mxu0 %v1061
        %1119 = vmatpush.msra.mxu0 %v1059
        %1120 = vmatmul.f32.gmra.mxu0 %v1082
        %v1121 = vpop.f32.mrf.mxu0
        %v1122 = vadd.f32 %v1079, %v1121
        %1123 = vdwg.mxu0
        %v1124 = vmul.f32 %v1102, 0.5
        %v1125 = vmul.f32 %v1122, 0.5
        %v1126 = vtanh.pop %v1124
        %v1127 = vtanh.pop %v1125
        %v1128 = vadd.f32 %v1126, 1.0
        %v1129 = vadd.f32 %v1127, 1.0
        %v1130 = vmul.f32 %v1128, 0.5
        %v1131 = vmul.f32 %v1129, 0.5
        %v1132 = vmul.f32 %v1130, 1.442695
        %v1133 = vpow.pop %v1132
        %v1134 = vmul.f32 %v1131, 1.442695
        %v1135 = vpow.pop %v1134
        %v1138 = vrot.slane %v1135, 4
        %v1139 = vsel %vm470, %v1133, %v1138
        %v1141 = vmul.f32 %v383, %v1139
        %1144 = vst.sshfl [vmem:[#allocation1] sm:$0xff pattern:$0x75316420] %v1130
        %1145 = vst.sshfl [vmem:[#allocation1 + $0x8] sm:$0xff pattern:$0x75316420] %v1131
        %s1146 = scalar_lea.vmem [#allocation1], 1
        %v1147 = vld [vmem:[%s1146] ss:$2 sm:$0xff]
        %v1149 = vadd.f32 %v1141, %v1147
        %1151 = vst [vmem:[#allocation1] ss:$2 sm:$0xff] %v1149
        %v1152 = vld.sshfl [vmem:[#allocation1] sm:$0xff pattern:$0x75316420]
        %v1153 = vld.sshfl [vmem:[#allocation1 + $0x8] sm:$0xff pattern:$0x75316420]
        %s1156 = scalar_lea.vmem [#allocation1], 1
        %1157 = vst [vmem:[%s1156] ss:$2 sm:$0xff] %v384
        %v1158 = vld.sshfl [vmem:[#allocation1] sm:$0xff pattern:$0x75316420]
        %v1159 = vld.sshfl [vmem:[#allocation1 + $0x8] sm:$0xff pattern:$0x75316420]
        %v1162 = vsel %vm470, %v1152, %v1158
        %v1163 = vsel %vm470, %v1153, %v1159
        %1164 = vst [vmem:[%s369] sm:$0xff] %v1162
        %1165 = vst [vmem:[%s369 + $0x8] sm:$0xff] %v1163
        %s1166 = sand.u32 %s252, 1
        %s1167 = scalar_lea.sflag [#allocation3], %s1166
        %s1168 = sand.u32 %s252, 1
        %s1169 = smul.addr %s1168, 16
        %s1170 = scalar_lea.vmem [#allocation2], %s1169
        // Predicated region
        $region61: #{tpu_custom_call.1} parent=59 // pred_check
          %p1171 = pneg %p262
        $region62: #{tpu_custom_call.1} parent=59 // pred_check_branch
          %1173 = sbr.rel (%p1171) target = $region64
        $region63: #{tpu_custom_call.1} parent=59 // pred_region
          %s1174 = smul.u32 2, %s24
          %1176 = vsyncadd %s1167, 0
          %s1177 = smul.addr %s1174, 8
          %s1178 = scalar_lea.hbm %s10, %s1177
          %s1180 = sshll.u32 %s1170, 4
          %s1181 = int_to_ptr.vmem [resolvable:$true] %s1180
          %s1182 = sshll.u32 %s1178, 4
          %s1183 = int_to_ptr.hbm [resolvable:$true] %s1182
          %1185 = dma.vmem_to_hbm [thread:$0]  %s1181, 256, %s1183, %s1167
        $region64: #{tpu_custom_call.1} parent=59 // pred_fallthru
          _
      $region60: #{tpu_custom_call.1} parent=5 // pred_fallthru
        _
      %p1186 = scmp.le.s32.totalorder 2, %s19
      // Predicated region
      $region65: #{tpu_custom_call.1} parent=5 // pred_check
        %p1187 = pneg %p1186
      $region66: #{tpu_custom_call.1} parent=5 // pred_check_branch
        %1189 = sbr.rel (%p1187) target = $region68
      $region67: #{tpu_custom_call.1} parent=5 // pred_region
        %s1190 = ssub.s32 %s19, 2
        // Predicated region
        $region69: #{tpu_custom_call.1} parent=67 // pred_check
          %p1191 = pneg %p268
        $region70: #{tpu_custom_call.1} parent=67 // pred_check_branch
          %1193 = sbr.rel (%p1191) target = $region72
        $region71: #{tpu_custom_call.1} parent=67 // pred_region
          %s1194 = sand.u32 %s253, 1
          %s1195 = scalar_lea.sflag [#allocation3], %s1194
          %s1196 = sand.u32 %s253, 1
          %s1197 = smul.addr %s1196, 16
          %s1198 = scalar_lea.vmem [#allocation2], %s1197
          %1200 = dma.done %s1195, 256
        $region72: #{tpu_custom_call.1} parent=67 // pred_fallthru
          _
      $region68: #{tpu_custom_call.1} parent=5 // pred_fallthru
        _
    $region6: #{tpu_custom_call.1} parent=1 // loop_footer
      %s23 = sadd.s32 1, %s19
    $region7: #{tpu_custom_call.1} parent=1 // loop_footer_branch
      %18 = sbr.rel target = $region3
    $region8: #{tpu_custom_call.1} parent=1 // loop_exit
      _
    %1201 = vsyncpa [#allocation3], 1
    %s1202 = scalar_lea.sflag [#allocation3], 1
    %1203 = vsyncpa %s1202, 1

</llo_original>
